<compile_context>
chip_gen: v7x
topology: tpu7x:2x2x1
jax: 0.10.0
libtpu: 0.0.40
codegen_flags: <defaults>
</compile_context>

<pallas_src>
import functools

import jax
import jax.numpy as jnp
from jax import lax
from jax.experimental import pallas as pl
from jax.experimental.pallas import tpu as pltpu


def _round_up(x: int, m: int) -> int:
    return (x + m - 1) // m * m


def _s_to_row(s, D):
    s = jnp.asarray(s, jnp.float32).reshape(-1)
    if s.size == 1:
        s = jnp.broadcast_to(s, (D,))
    elif s.size != D:
        raise ValueError("only 'global' and 'dimension' threshold types supported")
    return s.reshape(1, D)


def _is_v5():
    try:
        return "v5" in jax.devices()[0].device_kind.lower()
    except Exception:  # pragma: no cover
        return False


# ---------------------------------------------------------------------------
# Path 1: tiled one-hot counts @ resident, pre-thresholded table (MXU)
# ---------------------------------------------------------------------------
def pep_prepare_matmul_table(v, s, gk: float = 1.0, *, bf16_mxu: bool = True,
                             tn: int | None = None):
    """Pre-soft-threshold, pad and (optionally) bf16-cast the table.

    This is a full-table pass; for a static table cache the result across
    forward calls instead of recomputing it per call.
    Returns (v_prepared, tn).
    """
    N, D = v.shape
    s_row = _s_to_row(s, D)
    gate = jax.nn.sigmoid(s_row) * gk
    v32 = jnp.asarray(v, jnp.float32)
    sparse_v = jnp.sign(v32) * jnp.maximum(jnp.abs(v32) - gate, 0.0)

    Dp = _round_up(D, 128)                       # lane-dense output / MXU N dim
    tn_ = int(tn) if tn is not None else min(2048, _round_up(N, 8))
    tn_ = _round_up(tn_, 8)
    Np = _round_up(N, tn_)
    dt = jnp.bfloat16 if bf16_mxu else jnp.float32
    v_p = jnp.zeros((Np, Dp), dt).at[:N, :D].set(sparse_v.astype(dt))
    return v_p, tn_


def pep_matmul_kernel(x_ref, v_ref, o_ref, *, bag_size: int, tn: int, nk: int):
    # x_ref : (tb, BAG) int32     -- bag indices for this batch tile
    # v_ref : (Np, Dp)  bf16/f32  -- pre-soft-thresholded table, RESIDENT in VMEM
    # o_ref : (tb, Dp)  f32
    tb = x_ref.shape[0]
    x = x_ref[...]                                                # (tb, BAG)
    # Hoisted out of the N-tile loop (JAX does not CSE broadcast_in_dim).
    row_ids = lax.broadcasted_iota(jnp.int32, (tb, tn), 1)
    o_ref[...] = jnp.zeros_like(o_ref)

    def body(k, carry):
        base = k * tn
        xk = x - base                             # subtract base once per tile
        counts = jnp.zeros((tb, tn), jnp.int32)   # int32 accumulation
        for j in range(bag_size):                 # bag_size small & static
            counts = counts + (xk[:, j:j + 1] == row_ids).astype(jnp.int32)
        start = pl.multiple_of(base, tn)
        tile = v_ref[pl.ds(start, tn), :]         # slice of the resident table
        # Single convert per tile; counts are exact small integers in bf16.
        o_ref[...] += jnp.dot(counts.astype(v_ref.dtype), tile,
                              preferred_element_type=jnp.float32)
        return carry

    lax.fori_loop(0, nk, body, 0, unroll=(nk <= 8))


# ---------------------------------------------------------------------------
# Path 2: scalar-prefetched, bag-blocked, double-buffered row gather (VPU)
# ---------------------------------------------------------------------------
def pep_gather_kernel(x_sm, s_ref, v_hbm, o_ref, rowbuf, sems, *,
                      gk: float, bag_size: int, bags_per_step: int):
    # x_sm   : (Bp*BAG,) int32 in SMEM (scalar prefetch)
    # s_ref  : (1, D) float32 in VMEM (resident)
    # v_hbm  : (N, D) table ref left in HBM (memory_space=pl.ANY)
    # o_ref  : (bags_per_step, D) float32 output block
    # rowbuf : (2, BAG, bags_per_step, D) VMEM scratch (double buffered)
    # sems   : (2,) DMA semaphores (one per slot; each row DMA signals its slot)
    g = pl.program_id(0)
    ng = pl.num_programs(0)
    rows = bags_per_step * bag_size

    def fetch(step, slot):
        base = step * rows
        for b_local in range(bags_per_step):
            for j in range(bag_size):
                idx = x_sm[base + b_local * bag_size + j]
                pltpu.make_async_copy(v_hbm.at[idx],
                                      rowbuf.at[slot, j, b_local],
                                      sems.at[slot]).start()

    # Prime the pipeline on the first step only (grid is sequential).
    @pl.when(g == 0)
    def _():
        fetch(0, 0)

    slot = g % 2

    # Prefetch next block's rows before waiting (also keeps SMEM index reads
    # ahead of the .wait(), which would break sst->sld forwarding).
    @pl.when(g + 1 < ng)
    def _():
        fetch(g + 1, 1 - slot)

    # Wait for this block's rows: every row DMA signalled sems[slot]; retire
    # one row-sized wait per issued copy.
    for _ in range(rows):
        pltpu.make_async_copy(v_hbm.at[0], rowbuf.at[slot, 0, 0],
                              sems.at[slot]).wait()

    gate = jax.nn.sigmoid(s_ref[...]) * gk                        # (1, D)
    rv = rowbuf[slot].astype(jnp.float32)                         # (BAG, bpb, D)
    sv = jnp.sign(rv) * jnp.maximum(jnp.abs(rv) - gate, 0.0)
    o_ref[...] = jnp.sum(sv, axis=0)                              # (bpb, D)


# ---------------------------------------------------------------------------
# Wrapper
# ---------------------------------------------------------------------------
def pep_embedding_forward(x, v, s, gk: float = 1.0, *, method: str | None = None,
                          bf16_mxu: bool = True, tb: int | None = None,
                          tn: int | None = None, bags_per_step: int | None = None,
                          prepared_table=None):
    """x: (B, BAG) int indices; v: (N, D) table; s: scalar/(1,)/(D,) threshold."""
    B, BAG = x.shape
    N, D = v.shape

    if method is None:
        # TODO(synk): re-derive this cutoff per TPU generation (VALU-bound one-hot
        # vs. DMA-latency-bound gather); flat N<=8192 is a conservative default.
        method = "matmul" if N <= 8192 else "gather"

    if method == "matmul":
        if prepared_table is None:
            # Full-table pass; cache across calls for a static table.
            v_p, tn_ = pep_prepare_matmul_table(v, s, gk, bf16_mxu=bf16_mxu, tn=tn)
        else:
            v_p, tn_ = prepared_table
        Np, Dp = v_p.shape
        nk = Np // tn_

        if tb is None:
            # v6e/v7x MXU passes are 256 wide; v5e is 128 wide.
            if B >= 256 and not _is_v5():
                tb_ = 256
            elif B >= 128:
                tb_ = 128
            else:
                tb_ = _round_up(B, 8)
        else:
            tb_ = _round_up(tb, 8)
        Bp = _round_up(B, tb_)

        x_p = jnp.zeros((Bp, BAG), jnp.int32).at[:B, :].set(x.astype(jnp.int32))

        kernel = functools.partial(pep_matmul_kernel, bag_size=int(BAG),
                                   tn=int(tn_), nk=int(nk))
        out = pl.pallas_call(
            kernel,
            out_shape=jax.ShapeDtypeStruct((Bp, Dp), jnp.float32),
            grid_spec=pltpu.PrefetchScalarGridSpec(
                num_scalar_prefetch=0,
                grid=(Bp // tb_,),                               # batch tiles only
                in_specs=[
                    pl.BlockSpec((tb_, BAG), lambda i: (i, 0)),  # x
                    pl.BlockSpec((Np, Dp), lambda i: (0, 0)),    # resident table
                ],
                out_specs=pl.BlockSpec((tb_, Dp), lambda i: (i, 0)),
            ),
            compiler_params=pltpu.CompilerParams(
                dimension_semantics=("parallel",),
                # Keep <= 32 MiB so the same config fits v7x's smaller VMEM.
                vmem_limit_bytes=32 * 1024 * 1024,
            ),
        )(x_p, v_p)
        return out[:B, :D]

    elif method == "gather":
        s_row = _s_to_row(s, D)
        bpb = bags_per_step if bags_per_step is not None else min(16, _round_up(B, 8))
        bpb = _round_up(int(bpb), 8)
        Bp = _round_up(B, bpb)

        # SMEM guard for the scalar-prefetched index vector.
        assert Bp * BAG * 4 <= (1 << 19), \
            "gather path: index prefetch too large for SMEM; chunk the batch"

        x_flat = jnp.zeros((Bp * BAG,), jnp.int32).at[:B * BAG].set(
            x.reshape(-1).astype(jnp.int32))

        kernel = functools.partial(pep_gather_kernel, gk=float(gk),
                                   bag_size=int(BAG), bags_per_step=int(bpb))
        out = pl.pallas_call(
            kernel,
            out_shape=jax.ShapeDtypeStruct((Bp, D), jnp.float32),
            grid_spec=pltpu.PrefetchScalarGridSpec(
                num_scalar_prefetch=1,                           # x lands in SMEM
                grid=(Bp // bpb,),
                in_specs=[
                    pl.BlockSpec((1, D), lambda g, xp: (0, 0)),  # s (resident)
                    pl.BlockSpec(memory_space=pl.ANY),           # v stays in HBM
                ],
                out_specs=pl.BlockSpec((bpb, D), lambda g, xp: (g, 0)),
                scratch_shapes=[
                    pltpu.VMEM((2, BAG, bpb, D), v.dtype),       # double buffer
                    pltpu.SemaphoreType.DMA((2,)),
                ],
            ),
            compiler_params=pltpu.CompilerParams(
                dimension_semantics=("arbitrary",),   # sequential: cross-step prefetch
                vmem_limit_bytes=32 * 1024 * 1024,
            ),
        )(x_flat, s_row, v)
        return out[:B, :]

    else:
        raise ValueError(f"unknown method: {method}")


def pep_embedding_reference(x, v, s, gk: float = 1.0):
    gate = jax.nn.sigmoid(jnp.asarray(s, jnp.float32)).reshape(1, -1) * gk
    v32 = jnp.asarray(v, jnp.float32)
    sparse_v = jnp.sign(v32) * jnp.maximum(jnp.abs(v32) - gate, 0.0)
    return sparse_v[x].sum(axis=1)


if __name__ == "__main__":
    key = jax.random.PRNGKey(0)

    # ---- Test 1: shapes consistent with the module's forward -----------------
    batch, bag_size = 8, 8          # embedding_bag 2-D input: (batch, bag)
    idx_num, latent_dim = 64, 32    # embedding table (idx_num, latent_dim)
    threshold_init = -3.0           # opt['threshold_init'], type 'dimension'
    gk = 1.0                        # self.gk (non-retrain path)

    k_v, k_x, k2_v, k2_x = jax.random.split(key, 4)
    limit = (6.0 / (idx_num + latent_dim)) ** 0.5        # xavier_uniform_
    v = jax.random.uniform(k_v, (idx_num, latent_dim), jnp.float32,
                           minval=-limit, maxval=limit)
    s = threshold_init * jnp.ones((latent_dim,), jnp.float32)
    x = jax.random.randint(k_x, (batch, bag_size), 0, idx_num, dtype=jnp.int32)

    ref = pep_embedding_reference(x, v, s, gk=gk)

    out_f32 = jax.block_until_ready(
        pep_embedding_forward(x, v, s, gk=gk, method="matmul", bf16_mxu=False))
    assert out_f32.shape == (batch, latent_dim)
    assert jnp.allclose(out_f32, ref, atol=1e-5, rtol=1e-5), "matmul f32 mismatch"

    out_bf = jax.block_until_ready(
        pep_embedding_forward(x, v, s, gk=gk, method="matmul"))   # bf16 MXU default
    assert jnp.allclose(out_bf, ref, atol=3e-2, rtol=3e-2), "matmul bf16 mismatch"

    out_g = jax.block_until_ready(
        pep_embedding_forward(x, v, s, gk=gk, method="gather"))
    assert out_g.shape == (batch, latent_dim)
    assert jnp.allclose(out_g, ref, atol=1e-5, rtol=1e-5), "gather mismatch"

    # ---- Test 2: non-aligned batch, multi N-tile fori_loop, multi-step gather -
    batch2, bag2, idx2, dim2 = 10, 4, 200, 32
    limit2 = (6.0 / (idx2 + dim2)) ** 0.5
    v2 = jax.random.uniform(k2_v, (idx2, dim2), jnp.float32,
                            minval=-limit2, maxval=limit2)
    s2 = jnp.asarray(-3.0, jnp.float32)                   # 'global' threshold
    x2 = jax.random.randint(k2_x, (batch2, bag2), 0, idx2, dtype=jnp.int32)
    ref2 = pep_embedding_reference(x2, v2, s2, gk=gk)

    out2_mm = jax.block_until_ready(
        pep_embedding_forward(x2, v2, s2, gk=gk, method="matmul",
                              bf16_mxu=False, tn=64))     # nk = 4 in-kernel tiles
    assert jnp.allclose(out2_mm, ref2, atol=1e-5, rtol=1e-5), "matmul multi-tile mismatch"

    out2_g = jax.block_until_ready(
        pep_embedding_forward(x2, v2, s2, gk=gk, method="gather",
                              bags_per_step=8))           # 2 grid steps -> prefetch path
    assert jnp.allclose(out2_g, ref2, atol=1e-5, rtol=1e-5), "gather multi-step mismatch"

    print("KERNEL_OK")
</pallas_src>

<mosaic_0001>
module attributes {stable_mosaic.version = 11 : i64} {
  func.func @pep_matmul_kernel(%arg0: i32, %arg1: memref<8x8xi32, #tpu.memory_space<vmem>>, %arg2: memref<64x128xf32, #tpu.memory_space<vmem>>, %arg3: memref<8x128xf32, #tpu.memory_space<vmem>>) attributes {dimension_semantics = [#tpu.dimension_semantics<parallel>], iteration_bounds = array<i64: 1>, scalar_prefetch = 0 : i64, scratch_operands = 0 : i64, tpu.core_type = #tpu.core_type<tc>, window_params = [{transform_indices = @transform_0, window_bounds = array<i64: 8, 8>}, {pipeline_mode = #tpu.pipeline_mode<synchronous>, transform_indices = @transform_1, window_bounds = array<i64: 64, 128>}, {transform_indices = @transform_2, window_bounds = array<i64: 8, 128>}]} {
    %c0 = arith.constant 0 : index
    %c0_0 = arith.constant 0 : index
    %0 = vector.load %arg1[%c0, %c0_0] : memref<8x8xi32, #tpu.memory_space<vmem>>, vector<8x8xi32>
    %1 = tpu.iota {dimensions = array<i32: 1>} : vector<8x64xi32>
    %cst = arith.constant 0.000000e+00 : f32
    %2 = vector.broadcast %cst : f32 to vector<8x128xf32>
    %c0_1 = arith.constant 0 : index
    %c0_2 = arith.constant 0 : index
    %3 = vector.load %arg3[%c0_1, %c0_2] : memref<8x128xf32, #tpu.memory_space<vmem>>, vector<8x128xf32>
    tpu.vector_store %arg3[%c0_1, %c0_2], %2 {strides = array<i32>} : memref<8x128xf32, #tpu.memory_space<vmem>>, vector<8x128xf32>,
    %c0_i32 = arith.constant 0 : i32
    %c64_i32 = arith.constant 64 : i32
    %4 = arith.muli %c0_i32, %c64_i32 : i32
    %5 = vector.broadcast %4 : i32 to vector<8x8xi32>
    %6 = arith.subi %0, %5 : vector<8x8xi32>
    %c0_i32_3 = arith.constant 0 : i32
    %7 = vector.broadcast %c0_i32_3 : i32 to vector<8x64xi32>
    %8 = vector.extract_strided_slice %6 {offsets = [0, 0], sizes = [8, 1], strides = [1, 1]} : vector<8x8xi32> to vector<8x1xi32>
    %9 = vector.broadcast %8 : vector<8x1xi32> to vector<8x64xi32>
    %10 = arith.cmpi eq, %9, %1 : vector<8x64xi32>
    %11 = arith.extui %10 : vector<8x64xi1> to vector<8x64xi32>
    %12 = arith.addi %7, %11 : vector<8x64xi32>
    %13 = vector.extract_strided_slice %6 {offsets = [0, 1], sizes = [8, 1], strides = [1, 1]} : vector<8x8xi32> to vector<8x1xi32>
    %14 = vector.broadcast %13 : vector<8x1xi32> to vector<8x64xi32>
    %15 = arith.cmpi eq, %14, %1 : vector<8x64xi32>
    %16 = arith.extui %15 : vector<8x64xi1> to vector<8x64xi32>
    %17 = arith.addi %12, %16 : vector<8x64xi32>
    %18 = vector.extract_strided_slice %6 {offsets = [0, 2], sizes = [8, 1], strides = [1, 1]} : vector<8x8xi32> to vector<8x1xi32>
    %19 = vector.broadcast %18 : vector<8x1xi32> to vector<8x64xi32>
    %20 = arith.cmpi eq, %19, %1 : vector<8x64xi32>
    %21 = arith.extui %20 : vector<8x64xi1> to vector<8x64xi32>
    %22 = arith.addi %17, %21 : vector<8x64xi32>
    %23 = vector.extract_strided_slice %6 {offsets = [0, 3], sizes = [8, 1], strides = [1, 1]} : vector<8x8xi32> to vector<8x1xi32>
    %24 = vector.broadcast %23 : vector<8x1xi32> to vector<8x64xi32>
    %25 = arith.cmpi eq, %24, %1 : vector<8x64xi32>
    %26 = arith.extui %25 : vector<8x64xi1> to vector<8x64xi32>
    %27 = arith.addi %22, %26 : vector<8x64xi32>
    %28 = vector.extract_strided_slice %6 {offsets = [0, 4], sizes = [8, 1], strides = [1, 1]} : vector<8x8xi32> to vector<8x1xi32>
    %29 = vector.broadcast %28 : vector<8x1xi32> to vector<8x64xi32>
    %30 = arith.cmpi eq, %29, %1 : vector<8x64xi32>
    %31 = arith.extui %30 : vector<8x64xi1> to vector<8x64xi32>
    %32 = arith.addi %27, %31 : vector<8x64xi32>
    %33 = vector.extract_strided_slice %6 {offsets = [0, 5], sizes = [8, 1], strides = [1, 1]} : vector<8x8xi32> to vector<8x1xi32>
    %34 = vector.broadcast %33 : vector<8x1xi32> to vector<8x64xi32>
    %35 = arith.cmpi eq, %34, %1 : vector<8x64xi32>
    %36 = arith.extui %35 : vector<8x64xi1> to vector<8x64xi32>
    %37 = arith.addi %32, %36 : vector<8x64xi32>
    %38 = vector.extract_strided_slice %6 {offsets = [0, 6], sizes = [8, 1], strides = [1, 1]} : vector<8x8xi32> to vector<8x1xi32>
    %39 = vector.broadcast %38 : vector<8x1xi32> to vector<8x64xi32>
    %40 = arith.cmpi eq, %39, %1 : vector<8x64xi32>
    %41 = arith.extui %40 : vector<8x64xi1> to vector<8x64xi32>
    %42 = arith.addi %37, %41 : vector<8x64xi32>
    %43 = vector.extract_strided_slice %6 {offsets = [0, 7], sizes = [8, 1], strides = [1, 1]} : vector<8x8xi32> to vector<8x1xi32>
    %44 = vector.broadcast %43 : vector<8x1xi32> to vector<8x64xi32>
    %45 = arith.cmpi eq, %44, %1 : vector<8x64xi32>
    %46 = arith.extui %45 : vector<8x64xi1> to vector<8x64xi32>
    %47 = arith.addi %42, %46 : vector<8x64xi32>
    %48 = tpu.assume_multiple %4, 64 : i32
    %49 = arith.index_cast %48 : i32 to index
    %c0_4 = arith.constant 0 : index
    %50 = vector.load %arg2[%49, %c0_4] : memref<64x128xf32, #tpu.memory_space<vmem>>, vector<64x128xf32>
    %c0_5 = arith.constant 0 : index
    %c0_6 = arith.constant 0 : index
    %51 = vector.load %arg3[%c0_5, %c0_6] : memref<8x128xf32, #tpu.memory_space<vmem>>, vector<8x128xf32>
    %52 = arith.sitofp %47 : vector<8x64xi32> to vector<8x64xf32>
    %cst_7 = arith.constant dense<0.000000e+00> : vector<8x128xf32>
    %53 = tpu.matmul %52, %50, %cst_7 {dimension_numbers = #tpu.dot_dimension_numbers<[1], [0], [0], [1], [0, 0, 1, 1], [], []>} : vector<8x64xf32>, vector<64x128xf32>, vector<8x128xf32> -> vector<8x128xf32>
    %54 = arith.addf %51, %53 : vector<8x128xf32>
    %c0_8 = arith.constant 0 : index
    %c0_9 = arith.constant 0 : index
    %55 = vector.load %arg3[%c0_8, %c0_9] : memref<8x128xf32, #tpu.memory_space<vmem>>, vector<8x128xf32>
    tpu.vector_store %arg3[%c0_8, %c0_9], %54 {strides = array<i32>} : memref<8x128xf32, #tpu.memory_space<vmem>>, vector<8x128xf32>,
    %c1_i32 = arith.constant 1 : i32
    return
  }
  func.func @transform_0(%arg0: i32) -> (i32, i32) {
    %c0_i32 = arith.constant 0 : i32
    %c0_i32_0 = arith.constant 0 : i32
    return %arg0, %c0_i32 : i32, i32
  }
  func.func @transform_1(%arg0: i32) -> (i32, i32) {
    %c0_i32 = arith.constant 0 : i32
    %c0_i32_0 = arith.constant 0 : i32
    %c0_i32_1 = arith.constant 0 : i32
    return %c0_i32, %c0_i32_0 : i32, i32
  }
  func.func @transform_2(%arg0: i32) -> (i32, i32) {
    %c0_i32 = arith.constant 0 : i32
    %c0_i32_0 = arith.constant 0 : i32
    return %arg0, %c0_i32 : i32, i32
  }
}

</mosaic_0001>

<llo_original>
// kernel: tpu_custom_call.1
$region0: #{tpu_custom_call.1}
  #allocation0 [shape = 'u32[]', space=smem, size = 0x4, offset = 0x4, fixed_abs, tag = 'smem constant byte address 0x4 - core index']
  #allocation1 [shape = 'u32[144,128]{1,0:T(1,128)}', space=vmem, size = 0x12000, scoped, tag = 'internal scratch']
  %s0 = inlined_call_operand.hbm [shape: s32[8,8], index: 0, kind: input, shape index: {}]
  %s1 = inlined_call_operand.hbm [shape: f32[64,128], index: 1, kind: input, shape index: {}]
  %s2 = inlined_call_operand.hbm [shape: f32[8,128], index: 2, kind: output, shape index: {}]
  %s3 = sld [smem:[#allocation0]]
  $region26: #{tpu_custom_call.1} parent=0
    _
  %s5 = ssub.s32 1, %s3
  %s6 = scalar_select 0, %s5, %s3
  $region1: #{tpu_custom_call.1} parent=0
    #allocation2 [shape = 'u8[4096]{0}', space=vmem, size = 0x1000, scoped, tag = 'input window, operand 0, single buffered']
    #allocation3 [shape = 's32[1]{0}', space=sflag, size = 0x4, scoped, tag = 'scoped memory for tpu_custom_call.1']
    #allocation4 [shape = 's32[1]{0}', space=sflag, size = 0x4, scoped, tag = 'scoped memory for tpu_custom_call.1']
    #allocation5 [shape = 'u8[32768]{0}', space=vmem, size = 0x8000, scoped, tag = 'input window, operand 1, single buffered']
    #allocation6 [shape = 's32[1]{0}', space=sflag, size = 0x4, scoped, tag = 'scoped memory for tpu_custom_call.1']
    #allocation7 [shape = 'u8[4096]{0}', space=vmem, size = 0x1000, scoped, tag = 'output window, operand 0, single buffered']
    %7 = vsyncpa [#allocation3], 0
    %8 = vsyncpa [#allocation6], 0
    %9 = vsyncpa [#allocation4], 0
    // Predicated region
    $region2: #{tpu_custom_call.1} parent=1 // pred_check
      _
    $region3: #{tpu_custom_call.1} parent=1 // pred_check_branch
      %11 = sbr.rel (0) target = $region5
    $region4: #{tpu_custom_call.1} parent=1 // pred_region
      %s13 = ssub.s32 128, 128
      %14 = vsyncadd [#allocation3], %s13
      %s16 = sshll.u32 [#allocation2], 4
      %s17 = int_to_ptr.vmem [resolvable:$true] %s16
      %19 = dma.hbm_to_vmem [thread:$0]  %s0, 128, %s17, [#allocation3]
    $region5: #{tpu_custom_call.1} parent=1 // pred_fallthru
      _
    // Predicated region
    $region6: #{tpu_custom_call.1} parent=1 // pred_check
      _
    $region7: #{tpu_custom_call.1} parent=1 // pred_check_branch
      %21 = sbr.rel (0) target = $region9
    $region8: #{tpu_custom_call.1} parent=1 // pred_region
      %s23 = ssub.s32 1024, 1024
      %24 = vsyncadd [#allocation6], %s23
      %s25 = sshll.u32 [#allocation5], 4
      %s26 = int_to_ptr.vmem [resolvable:$true] %s25
      %31 = dma.hbm_to_vmem [thread:$0]  %s1, 1024, %s26, [#allocation6], 128, 128, 8
    $region9: #{tpu_custom_call.1} parent=1 // pred_fallthru
      _
    // Predicated region
    $region10: #{tpu_custom_call.1} parent=1 // pred_check
      _
    $region11: #{tpu_custom_call.1} parent=1 // pred_check_branch
      %33 = sbr.rel (0) target = $region13
    $region12: #{tpu_custom_call.1} parent=1 // pred_region
      %34 = dma.done [#allocation3], 128
    $region13: #{tpu_custom_call.1} parent=1 // pred_fallthru
      _
    // Predicated region
    $region14: #{tpu_custom_call.1} parent=1 // pred_check
      _
    $region15: #{tpu_custom_call.1} parent=1 // pred_check_branch
      %36 = sbr.rel (0) target = $region17
    $region16: #{tpu_custom_call.1} parent=1 // pred_region
      %37 = dma.done [#allocation6], 1024
    $region17: #{tpu_custom_call.1} parent=1 // pred_fallthru
      _
    %v38 = vld [vmem:[#allocation2] sm:$0xff]
    %v39 = vlaneseq
    %v40 = vand.u32 %v39, 127
    %41 = vst [vmem:[#allocation7] sm:$0xff] 0.0
    %42 = vset.pattern.permute.xlu0 0
    %43 = vperm.xlu0 %42, %v38
    %v44 = vpop.permute.xlu0 %43
    %vm45 = vcmp.eq.s32.totalorder %v44, %v40
    %v46 = vsel %vm45, 1, 0
    %47 = vset.pattern.permute.xlu0 1
    %48 = vperm.xlu0 %47, %v38
    %v49 = vpop.permute.xlu0 %48
    %vm50 = vcmp.eq.s32.totalorder %v49, %v40
    %v51 = vsel %vm50, 1, 0
    %v52 = vadd.s32 %v46, %v51
    %53 = vset.pattern.permute.xlu0 2
    %54 = vperm.xlu0 %53, %v38
    %v55 = vpop.permute.xlu0 %54
    %vm56 = vcmp.eq.s32.totalorder %v55, %v40
    %v57 = vsel %vm56, 1, 0
    %v58 = vadd.s32 %v52, %v57
    %59 = vset.pattern.permute.xlu0 3
    %60 = vperm.xlu0 %59, %v38
    %v61 = vpop.permute.xlu0 %60
    %vm62 = vcmp.eq.s32.totalorder %v61, %v40
    %v63 = vsel %vm62, 1, 0
    %v64 = vadd.s32 %v58, %v63
    %65 = vset.pattern.permute.xlu0 4
    %66 = vperm.xlu0 %65, %v38
    %v67 = vpop.permute.xlu0 %66
    %vm68 = vcmp.eq.s32.totalorder %v67, %v40
    %v69 = vsel %vm68, 1, 0
    %v70 = vadd.s32 %v64, %v69
    %71 = vset.pattern.permute.xlu0 5
    %72 = vperm.xlu0 %71, %v38
    %v73 = vpop.permute.xlu0 %72
    %vm74 = vcmp.eq.s32.totalorder %v73, %v40
    %v75 = vsel %vm74, 1, 0
    %v76 = vadd.s32 %v70, %v75
    %77 = vset.pattern.permute.xlu0 6
    %78 = vperm.xlu0 %77, %v38
    %v79 = vpop.permute.xlu0 %78
    %vm80 = vcmp.eq.s32.totalorder %v79, %v40
    %v81 = vsel %vm80, 1, 0
    %v82 = vadd.s32 %v76, %v81
    %83 = vset.pattern.permute.xlu0 7
    %84 = vperm.xlu0 %83, %v38
    %v85 = vpop.permute.xlu0 %84
    %vm86 = vcmp.eq.s32.totalorder %v85, %v40
    %v87 = vsel %vm86, 1, 0
    %v88 = vadd.s32 %v82, %v87
    %v89 = vld [vmem:[#allocation5] sm:$0xff]
    %v90 = vld [vmem:[#allocation5 + $0x8] sm:$0xff]
    %v91 = vld [vmem:[#allocation5 + $0x10] sm:$0xff]
    %v92 = vld [vmem:[#allocation5 + $0x18] sm:$0xff]
    %v93 = vld [vmem:[#allocation5 + $0x20] sm:$0xff]
    %v94 = vld [vmem:[#allocation5 + $0x28] sm:$0xff]
    %v95 = vld [vmem:[#allocation5 + $0x30] sm:$0xff]
    %v96 = vld [vmem:[#allocation5 + $0x38] sm:$0xff]
    %v97 = vld [vmem:[#allocation7] sm:$0xff]
    %v98 = vcvt.s32.f32 %v88
    %vm99 = vcmask 523264
    %v101 = vsel %vm99, %v98, 0
    %103 = vmatprep.subr.mxu0 0.0
    %104 = vmatpush1.msra.mxu0 %v89
    %105 = vmatprep.subr.mxu0 0.0
    %106 = vmatpush1.msra.mxu0 %v90
    %107 = vmatprep.subr.mxu0 0.0
    %108 = vmatpush1.msra.mxu0 %v91
    %109 = vmatprep.subr.mxu0 0.0
    %110 = vmatpush1.msra.mxu0 %v92
    %111 = vmatprep.subr.mxu0 0.0
    %112 = vmatpush1.msra.mxu0 %v93
    %113 = vmatprep.subr.mxu0 0.0
    %114 = vmatpush1.msra.mxu0 %v94
    %115 = vmatprep.subr.mxu0 0.0
    %116 = vmatpush1.msra.mxu0 %v95
    %117 = vmatprep.subr.mxu0 0.0
    %118 = vmatpush1.msra.mxu0 %v96
    %119 = vmatprep.subr.mxu0 0.0
    %120 = vmatpush1.msra.mxu0 0.0
    %121 = vmatprep.subr.mxu0 0.0
    %122 = vmatpush1.msra.mxu0 0.0
    %123 = vmatprep.subr.mxu0 0.0
    %124 = vmatpush1.msra.mxu0 0.0
    %125 = vmatprep.subr.mxu0 0.0
    %126 = vmatpush1.msra.mxu0 0.0
    %127 = vmatprep.subr.mxu0 0.0
    %128 = vmatpush1.msra.mxu0 0.0
    %129 = vmatprep.subr.mxu0 0.0
    %130 = vmatpush1.msra.mxu0 0.0
    %131 = vmatprep.subr.mxu0 0.0
    %132 = vmatpush1.msra.mxu0 0.0
    %133 = vmatprep.subr.mxu0 0.0
    %134 = vmatpush1.msra.mxu0 0.0
    %135 = vmatprep.subr.mxu0 0.0
    %136 = vmatpush1.msra.mxu0 0.0
    %137 = vmatprep.subr.mxu0 0.0
    %138 = vmatpush1.msra.mxu0 0.0
    %139 = vmatprep.subr.mxu0 0.0
    %140 = vmatpush1.msra.mxu0 0.0
    %141 = vmatprep.subr.mxu0 0.0
    %142 = vmatpush1.msra.mxu0 0.0
    %143 = vmatprep.subr.mxu0 0.0
    %144 = vmatpush1.msra.mxu0 0.0
    %145 = vmatprep.subr.mxu0 0.0
    %146 = vmatpush1.msra.mxu0 0.0
    %147 = vmatprep.subr.mxu0 0.0
    %148 = vmatpush1.msra.mxu0 0.0
    %149 = vmatprep.subr.mxu0 0.0
    %150 = vmatpush1.msra.mxu0 0.0
    %151 = vmatprep.subr.mxu0 0.0
    %152 = vmatpush1.msra.mxu0 0.0
    %153 = vmatprep.subr.mxu0 0.0
    %154 = vmatpush1.msra.mxu0 0.0
    %155 = vmatprep.subr.mxu0 0.0
    %156 = vmatpush1.msra.mxu0 0.0
    %157 = vmatprep.subr.mxu0 0.0
    %158 = vmatpush1.msra.mxu0 0.0
    %159 = vmatprep.subr.mxu0 0.0
    %160 = vmatpush1.msra.mxu0 0.0
    %161 = vmatprep.subr.mxu0 0.0
    %162 = vmatpush1.msra.mxu0 0.0
    %163 = vmatprep.subr.mxu0 0.0
    %164 = vmatpush1.msra.mxu0 0.0
    %165 = vmatprep.subr.mxu0 0.0
    %166 = vmatpush1.msra.mxu0 0.0
    %167 = vmatprep.mubr.f32.mxu0 0.0
    %168 = vmatmul.mubr.f32.gmra.mrb[0].mxu0 %v101
    %v169 = vpop.f32.mrb[0].mxu0
    %v170 = vadd.f32 0.0, %v169
    %v171 = vpop.f32.mrb[0].mxu0
    %172 = vdwg.mxu0
    %v173 = vadd.f32 %v97, %v170
    %174 = vst [vmem:[#allocation7] sm:$0xff] %v173
    // Predicated region
    $region18: #{tpu_custom_call.1} parent=1 // pred_check
      _
    $region19: #{tpu_custom_call.1} parent=1 // pred_check_branch
      %176 = sbr.rel (0) target = $region21
    $region20: #{tpu_custom_call.1} parent=1 // pred_region
      %s178 = ssub.s32 128, 128
      %179 = vsyncadd [#allocation4], %s178
      %s181 = sshll.u32 [#allocation7], 4
      %s182 = int_to_ptr.vmem [resolvable:$true] %s181
      %184 = dma.vmem_to_hbm [thread:$0]  %s182, 128, %s2, [#allocation4]
    $region21: #{tpu_custom_call.1} parent=1 // pred_fallthru
      _
    // Predicated region
    $region22: #{tpu_custom_call.1} parent=1 // pred_check
      _
    $region23: #{tpu_custom_call.1} parent=1 // pred_check_branch
      %186 = sbr.rel (0) target = $region25
    $region24: #{tpu_custom_call.1} parent=1 // pred_region
      %187 = dma.done [#allocation4], 128
    $region25: #{tpu_custom_call.1} parent=1 // pred_fallthru
      _
    %188 = vsyncpa [#allocation3], 1
    %189 = vsyncpa [#allocation6], 1
    %190 = vsyncpa [#allocation4], 1

</llo_original>
